<compile_context>
chip_gen: v5e
topology: v5e:2x2
jax: 0.10.0
libtpu: 0.0.40
codegen_flags: <defaults>
</compile_context>

<pallas_src>
import functools

import jax
import jax.numpy as jnp
from jax.experimental import pallas as pl
from jax.experimental.pallas import tpu as pltpu


# ----------------------------- Pallas kernels ------------------------------

def _mm_single_k_kernel(a_ref, b_ref, *rest, apply_relu, has_bias):
    """o = [relu]([a @ b] [+ bias]); whole K in one tile, no accumulator."""
    if has_bias:
        bias_ref, o_ref = rest
    else:
        (o_ref,) = rest
    h = jnp.dot(a_ref[...], b_ref[...], preferred_element_type=jnp.float32)
    if has_bias:
        h = h + bias_ref[...]          # (1, tn) broadcasts over rows (f32)
    if apply_relu:
        h = jnp.maximum(h, 0.0)
    o_ref[...] = h.astype(o_ref.dtype)


def _mm_multi_k_f32out_kernel(a_ref, b_ref, *rest, apply_relu, has_bias):
    """f32 output: accumulate directly into the VMEM-resident output block."""
    if has_bias:
        bias_ref, o_ref = rest
    else:
        (o_ref,) = rest
    k = pl.program_id(2)

    @pl.when(k == 0)
    def _():
        o_ref[...] = jnp.zeros_like(o_ref)

    o_ref[...] += jnp.dot(a_ref[...], b_ref[...],
                          preferred_element_type=jnp.float32)

    if has_bias or apply_relu:
        @pl.when(k == pl.num_programs(2) - 1)
        def _():
            h = o_ref[...]
            if has_bias:
                h = h + bias_ref[...]
            if apply_relu:
                h = jnp.maximum(h, 0.0)
            o_ref[...] = h


def _mm_multi_k_acc_kernel(a_ref, b_ref, *rest, apply_relu, has_bias):
    """Non-f32 output: f32 VMEM accumulator, cast at the final k step."""
    if has_bias:
        bias_ref, o_ref, acc_ref = rest
    else:
        o_ref, acc_ref = rest
    k = pl.program_id(2)

    @pl.when(k == 0)
    def _():
        acc_ref[...] = jnp.zeros_like(acc_ref)

    acc_ref[...] += jnp.dot(a_ref[...], b_ref[...],
                            preferred_element_type=jnp.float32)

    @pl.when(k == pl.num_programs(2) - 1)
    def _():
        h = acc_ref[...]
        if has_bias:
            h = h + bias_ref[...]
        if apply_relu:
            h = jnp.maximum(h, 0.0)
        o_ref[...] = h.astype(o_ref.dtype)


# ------------------------------ wrappers ------------------------------------

def _round_up(x, m):
    return (x + m - 1) // m * m


def _pad_dim(dim, max_tile=512):
    """Pad so the tile we actually want always divides: <=512 dims become a
    single 128-multiple tile, larger dims become a multiple of 512."""
    p = _round_up(dim, 128)
    if p > max_tile:
        p = _round_up(p, max_tile)
    return p


def _pick_tile(padded_dim, max_tile=512):
    """padded_dim comes from _pad_dim: either <= 512 or a multiple of 512."""
    if padded_dim <= 512:
        return padded_dim
    for c in (max_tile, 512):
        if c <= padded_dim and padded_dim % c == 0:
            return c
    return 512


def tiled_matmul(a, b, bias=None, apply_relu=False, out_dtype=jnp.float32,
                 tm_max=512, tn_full=False, a_extra_buffers=False):
    """[relu](a @ b [+ bias]).  a:[M,K], b:[K,N], bias:[N] f32.

    All dims must be padded by _pad_dim (multiples of 128; >512 dims are
    multiples of 512) so every load/store is lane-dense and unmasked.
    """
    M, K = a.shape
    K2, N = b.shape
    assert K == K2 and M % 128 == 0 and N % 128 == 0 and K % 128 == 0

    tm = _pick_tile(M, tm_max)
    tn = N if tn_full else _pick_tile(N)
    tk = _pick_tile(K)
    assert M % tm == 0 and N % tn == 0 and K % tk == 0
    gm, gn, gk = M // tm, N // tn, K // tk

    has_bias = bias is not None
    args = [a, b]
    if has_bias:
        args.append(bias.reshape(1, N).astype(jnp.float32))

    out_item = jnp.dtype(out_dtype).itemsize
    # bytes_accessed includes operand re-fetches (A per column tile, B per row
    # tile) so XLA's scheduler sees realistic HBM traffic for this call.
    cost = pl.CostEstimate(
        flops=2 * M * N * K,
        transcendentals=0,
        bytes_accessed=(a.size * a.dtype.itemsize * gn
                        + b.size * b.dtype.itemsize * gm
                        + (N * 4 if has_bias else 0)
                        + M * N * out_item))

    out_shape = jax.ShapeDtypeStruct((M, N), out_dtype)

    if gk == 1:
        # Degenerate reduction: drop the k axis, the accumulator and the
        # pl.when init/epilogue entirely.
        in_specs = [pl.BlockSpec((tm, K), lambda i, j: (i, 0)),
                    pl.BlockSpec((K, tn), lambda i, j: (0, j))]
        if has_bias:
            in_specs.append(pl.BlockSpec((1, tn), lambda i, j: (0, j)))
        return pl.pallas_call(
            functools.partial(_mm_single_k_kernel,
                              apply_relu=apply_relu, has_bias=has_bias),
            out_shape=out_shape,
            grid=(gm, gn),
            in_specs=in_specs,
            out_specs=pl.BlockSpec((tm, tn), lambda i, j: (i, j)),
            compiler_params=pltpu.CompilerParams(
                dimension_semantics=("parallel", "parallel")),
            cost_estimate=cost,
        )(*args)

    # Multi-step reduction: k is the last grid axis.
    if a_extra_buffers and gk >= 3:
        # Deeper pipelining on the streamed A operand (hides DMA jitter on
        # long reductions, e.g. v6e).
        a_spec = pl.BlockSpec((tm, tk), lambda i, j, k: (i, k),
                              pipeline_mode=pl.Buffered(3))
    else:
        a_spec = pl.BlockSpec((tm, tk), lambda i, j, k: (i, k))
    in_specs = [a_spec, pl.BlockSpec((tk, tn), lambda i, j, k: (k, j))]
    if has_bias:
        in_specs.append(pl.BlockSpec((1, tn), lambda i, j, k: (0, j)))

    common = dict(
        out_shape=out_shape,
        grid=(gm, gn, gk),
        in_specs=in_specs,
        out_specs=pl.BlockSpec((tm, tn), lambda i, j, k: (i, j)),
        compiler_params=pltpu.CompilerParams(
            dimension_semantics=("parallel", "parallel", "arbitrary")),
        cost_estimate=cost,
    )

    if jnp.dtype(out_dtype) == jnp.dtype(jnp.float32):
        # Accumulate directly in the VMEM-resident output block; no scratch.
        return pl.pallas_call(
            functools.partial(_mm_multi_k_f32out_kernel,
                              apply_relu=apply_relu, has_bias=has_bias),
            **common,
        )(*args)

    return pl.pallas_call(
        functools.partial(_mm_multi_k_acc_kernel,
                          apply_relu=apply_relu, has_bias=has_bias),
        scratch_shapes=[pltpu.VMEM((tm, tn), jnp.float32)],
        **common,
    )(*args)


def gcn_layer(a_norm_bf16, x_bf16, w_bf16, b_f32, out_dtype):
    """relu(A_norm @ (x @ W) + b); bf16 MXU operands, f32 accumulation."""
    # Feature transform XW, computed once per layer (not per row tile).
    xw = tiled_matmul(x_bf16, w_bf16, out_dtype=jnp.bfloat16)
    nhid_pad = xw.shape[1]
    # Aggregation: stream A_norm exactly once (tn = full hidden width when it
    # fits), tm up to 1024 to cut XW re-fetches, bias+ReLU epilogue.
    return tiled_matmul(a_norm_bf16, xw, bias=b_f32, apply_relu=True,
                        out_dtype=out_dtype, tm_max=1024,
                        tn_full=(nhid_pad <= 1024), a_extra_buffers=True)


# ------------------------------ JAX glue -------------------------------------

def build_norm_adj_padded(edge_index, num_nodes, padded_nodes):
    """D^{-1/2} (A + I) D^{-1/2}, built directly at padded size, cast to bf16.

    Matches PyG gcn_norm + add_remaining_self_loops: duplicate non-self-loop
    edges accumulate; every node gets exactly one weight-1 self loop
    (input self-loop edges are replaced, not added to).  Padded rows/cols stay
    zero and contribute nothing.
    """
    src = edge_index[0]
    dst = edge_index[1]
    w = jnp.where(src != dst, 1.0, 0.0).astype(jnp.float32)
    a = jnp.zeros((padded_nodes, padded_nodes), jnp.float32)
    a = a.at[dst, src].add(w)                       # messages flow src -> dst
    diag = jnp.arange(num_nodes)
    a = a.at[diag, diag].set(1.0)                   # remaining self-loops
    deg = a.sum(axis=1)
    d_inv_sqrt = jnp.where(deg > 0.0, jax.lax.rsqrt(deg), 0.0)
    return (d_inv_sqrt[:, None] * a * d_inv_sqrt[None, :]).astype(jnp.bfloat16)


def init_encoder_params(key, nfeat, nhid):
    """Glorot-style init for gc1/gc2 weights + zero biases."""
    k1, k2 = jax.random.split(key)
    s1 = (6.0 / (nfeat + nhid)) ** 0.5
    s2 = (6.0 / (nhid + nhid)) ** 0.5
    w1 = jax.random.uniform(k1, (nfeat, nhid), jnp.float32, -s1, s1)
    w2 = jax.random.uniform(k2, (nhid, nhid), jnp.float32, -s2, s2)
    b1 = jnp.zeros((nhid,), jnp.float32)
    b2 = jnp.zeros((nhid,), jnp.float32)
    return {"w1": w1, "b1": b1, "w2": w2, "b2": b2}


def encoder_forward(params, x, edge_index, dropout_p=0.5):
    n, f_in = x.shape
    nhid = params["w1"].shape[1]

    # Pad so the chosen tiles always divide (no 128-tile fallback for dims
    # like 640/896).  Zero padding is exact for the sliced-out result.
    n_pad = _pad_dim(n)
    f_in_pad = _pad_dim(f_in)
    nhid_pad = _pad_dim(nhid)

    # Normalized adjacency built once at padded size, single cast to bf16.
    a_pad = build_norm_adj_padded(edge_index, n, n_pad)

    # Pad + cast the remaining operands exactly once (bf16 MXU inputs).
    x_pad = jnp.zeros((n_pad, f_in_pad), jnp.bfloat16
                      ).at[:n, :f_in].set(x.astype(jnp.bfloat16))
    w1_pad = jnp.zeros((f_in_pad, nhid_pad), jnp.bfloat16
                       ).at[:f_in, :nhid].set(params["w1"].astype(jnp.bfloat16))
    w2_pad = jnp.zeros((nhid_pad, nhid_pad), jnp.bfloat16
                       ).at[:nhid, :nhid].set(params["w2"].astype(jnp.bfloat16))
    b1_pad = jnp.zeros((nhid_pad,), jnp.float32).at[:nhid].set(params["b1"])
    b2_pad = jnp.zeros((nhid_pad,), jnp.float32).at[:nhid].set(params["b2"])

    # Layer-1 output stays bf16: it only feeds layer 2's XW matmul.
    x1 = gcn_layer(a_pad, x_pad, w1_pad, b1_pad, out_dtype=jnp.bfloat16)
    # TODO(synk): F.dropout with training=True (random mask via pltpu.prng_*)
    # not implemented; eval-mode semantics (identity) are used here.
    x2 = gcn_layer(a_pad, x1, w2_pad, b2_pad, out_dtype=jnp.float32)
    return x2[:n, :nhid]


# ------------------------------- demo ----------------------------------------

if __name__ == "__main__":
    N, NFEAT, NHID, E = 16, 8, 32, 40
    DROPOUT = 0.5

    key = jax.random.PRNGKey(0)
    k_x, k_src, k_dst, k_par = jax.random.split(key, 4)

    x = jax.random.normal(k_x, (N, NFEAT), jnp.float32)
    src = jax.random.randint(k_src, (E,), 0, N, dtype=jnp.int32)
    dst = jax.random.randint(k_dst, (E,), 0, N, dtype=jnp.int32)
    edge_index = jnp.stack([src, dst], axis=0)   # [2, E]

    params = init_encoder_params(k_par, NFEAT, NHID)

    out = encoder_forward(params, x, edge_index, DROPOUT)
    jax.block_until_ready(out)

    # Pure-f32 reference (same math) for a loose bf16 tolerance check.
    def ref_forward(params, x, edge_index):
        n = x.shape[0]
        s, d = edge_index[0], edge_index[1]
        w = jnp.where(s != d, 1.0, 0.0).astype(jnp.float32)
        a = jnp.zeros((n, n), jnp.float32).at[d, s].add(w)
        a = a.at[jnp.arange(n), jnp.arange(n)].set(1.0)
        deg = a.sum(axis=1)
        dis = jnp.where(deg > 0.0, jax.lax.rsqrt(deg), 0.0)
        an = dis[:, None] * a * dis[None, :]
        h1 = jnp.maximum(an @ (x @ params["w1"]) + params["b1"], 0.0)
        h2 = jnp.maximum(an @ (h1 @ params["w2"]) + params["b2"], 0.0)
        return h2

    ref = ref_forward(params, x, edge_index)
    err = float(jnp.max(jnp.abs(out - ref)))
    scale = max(1.0, float(jnp.max(jnp.abs(ref))))

    assert out.shape == (N, NHID)
    assert bool(jnp.all(out >= 0.0))
    assert err < 0.05 * scale, f"max abs err {err} vs scale {scale}"
    print("KERNEL_OK")
</pallas_src>

<mosaic_0001>
module attributes {stable_mosaic.version = 11 : i64} {
  func.func @_mm_single_k_kernel(%arg0: i32, %arg1: i32, %arg2: memref<128x128xbf16, #tpu.memory_space<vmem>>, %arg3: memref<128x128xbf16, #tpu.memory_space<vmem>>, %arg4: memref<128x128xbf16, #tpu.memory_space<vmem>>) attributes {dimension_semantics = [#tpu.dimension_semantics<parallel>, #tpu.dimension_semantics<parallel>], iteration_bounds = array<i64: 1, 1>, scalar_prefetch = 0 : i64, scratch_operands = 0 : i64, tpu.core_type = #tpu.core_type<tc>, window_params = [{transform_indices = @transform_0, window_bounds = array<i64: 128, 128>}, {transform_indices = @transform_1, window_bounds = array<i64: 128, 128>}, {transform_indices = @transform_2, window_bounds = array<i64: 128, 128>}]} {
    %c0 = arith.constant 0 : index
    %c0_0 = arith.constant 0 : index
    %0 = vector.load %arg2[%c0, %c0_0] : memref<128x128xbf16, #tpu.memory_space<vmem>>, vector<128x128xbf16>
    %c0_1 = arith.constant 0 : index
    %c0_2 = arith.constant 0 : index
    %1 = vector.load %arg3[%c0_1, %c0_2] : memref<128x128xbf16, #tpu.memory_space<vmem>>, vector<128x128xbf16>
    %cst = arith.constant dense<0.000000e+00> : vector<128x128xf32>
    %2 = tpu.matmul %0, %1, %cst {dimension_numbers = #tpu.dot_dimension_numbers<[1], [0], [0], [1], [0, 0, 1, 1], [], []>} : vector<128x128xbf16>, vector<128x128xbf16>, vector<128x128xf32> -> vector<128x128xf32>
    %3 = arith.truncf %2 : vector<128x128xf32> to vector<128x128xbf16>
    %c0_3 = arith.constant 0 : index
    %c0_4 = arith.constant 0 : index
    %4 = vector.load %arg4[%c0_3, %c0_4] : memref<128x128xbf16, #tpu.memory_space<vmem>>, vector<128x128xbf16>
    tpu.vector_store %arg4[%c0_3, %c0_4], %3 {strides = array<i32>} : memref<128x128xbf16, #tpu.memory_space<vmem>>, vector<128x128xbf16>,
    return
  }
  func.func @transform_0(%arg0: i32, %arg1: i32) -> (i32, i32) {
    %c0_i32 = arith.constant 0 : i32
    %c0_i32_0 = arith.constant 0 : i32
    return %arg0, %c0_i32 : i32, i32
  }
  func.func @transform_1(%arg0: i32, %arg1: i32) -> (i32, i32) {
    %c0_i32 = arith.constant 0 : i32
    %c0_i32_0 = arith.constant 0 : i32
    return %c0_i32, %arg1 : i32, i32
  }
  func.func @transform_2(%arg0: i32, %arg1: i32) -> (i32, i32) {
    %c0_i32 = arith.constant 0 : i32
    return %arg0, %arg1 : i32, i32
  }
}

</mosaic_0001>

<llo_original>
// kernel: tpu_custom_call.1
$region0: #{tpu_custom_call.1}
  #allocation0 [shape = 'u32[]', space=smem, size = 0x4, offset = 0x4, fixed_abs, tag = 'smem constant byte address 0x4 - core index']
  #allocation1 [shape = 'u32[72,128]{1,0:T(1,128)}', space=vmem, size = 0x9000, scoped, tag = 'internal scratch']
  %s0 = inlined_call_operand.hbm [shape: bf16[128,128], index: 0, kind: input, shape index: {}]
  %s1 = inlined_call_operand.hbm [shape: bf16[128,128], index: 1, kind: input, shape index: {}]
  %s2 = inlined_call_operand.hbm [shape: bf16[128,128], index: 2, kind: output, shape index: {}]
  %s3 = sld [smem:[#allocation0]]
  $region26: #{tpu_custom_call.1} parent=0
    _
  %s5 = ssub.s32 1, %s3
  %s6 = scalar_select 0, %s5, %s3
  $region1: #{tpu_custom_call.1} parent=0
    #allocation2 [shape = 'u8[32768]{0}', space=vmem, size = 0x8000, scoped, tag = 'input window, operand 0, single buffered']
    #allocation3 [shape = 's32[1]{0}', space=sflag, size = 0x4, scoped, tag = 'scoped memory for tpu_custom_call.1']
    #allocation4 [shape = 's32[1]{0}', space=sflag, size = 0x4, scoped, tag = 'scoped memory for tpu_custom_call.1']
    #allocation5 [shape = 'u8[32768]{0}', space=vmem, size = 0x8000, scoped, tag = 'input window, operand 1, single buffered']
    #allocation6 [shape = 's32[1]{0}', space=sflag, size = 0x4, scoped, tag = 'scoped memory for tpu_custom_call.1']
    #allocation7 [shape = 'u8[32768]{0}', space=vmem, size = 0x8000, scoped, tag = 'output window, operand 0, single buffered']
    %7 = vsyncpa [#allocation3], 0
    %8 = vsyncpa [#allocation6], 0
    %9 = vsyncpa [#allocation4], 0
    // Predicated region
    $region2: #{tpu_custom_call.1} parent=1 // pred_check
      _
    $region3: #{tpu_custom_call.1} parent=1 // pred_check_branch
      %11 = sbr.rel (0) target = $region5
    $region4: #{tpu_custom_call.1} parent=1 // pred_region
      %13 = vsyncadd [#allocation3], 0
      %s14 = sshll.u32 %s0, 4
      %s15 = int_to_ptr.hbm [resolvable:$true] %s14
      %s16 = sshll.u32 [#allocation2], 4
      %s17 = int_to_ptr.vmem [resolvable:$true] %s16
      %22 = dma.hbm_to_vmem [thread:$0]  %s15, 1024, %s17, [#allocation3], 64, 64, 4
    $region5: #{tpu_custom_call.1} parent=1 // pred_fallthru
      _
    // Predicated region
    $region6: #{tpu_custom_call.1} parent=1 // pred_check
      _
    $region7: #{tpu_custom_call.1} parent=1 // pred_check_branch
      %24 = sbr.rel (0) target = $region9
    $region8: #{tpu_custom_call.1} parent=1 // pred_region
      %26 = vsyncadd [#allocation6], 0
      %s27 = sshll.u32 %s1, 4
      %s28 = int_to_ptr.hbm [resolvable:$true] %s27
      %s29 = sshll.u32 [#allocation5], 4
      %s30 = int_to_ptr.vmem [resolvable:$true] %s29
      %35 = dma.hbm_to_vmem [thread:$0]  %s28, 1024, %s30, [#allocation6], 64, 64, 4
    $region9: #{tpu_custom_call.1} parent=1 // pred_fallthru
      _
    // Predicated region
    $region10: #{tpu_custom_call.1} parent=1 // pred_check
      _
    $region11: #{tpu_custom_call.1} parent=1 // pred_check_branch
      %37 = sbr.rel (0) target = $region13
    $region12: #{tpu_custom_call.1} parent=1 // pred_region
      %39 = dma.done [#allocation3], 1024
    $region13: #{tpu_custom_call.1} parent=1 // pred_fallthru
      _
    // Predicated region
    $region14: #{tpu_custom_call.1} parent=1 // pred_check
      _
    $region15: #{tpu_custom_call.1} parent=1 // pred_check_branch
      %41 = sbr.rel (0) target = $region17
    $region16: #{tpu_custom_call.1} parent=1 // pred_region
      %43 = dma.done [#allocation6], 1024
    $region17: #{tpu_custom_call.1} parent=1 // pred_fallthru
      _
    %v44 = vld [vmem:[#allocation2] sm:$0xf]
    %v45 = vld [vmem:[#allocation2 + $0x4] sm:$0xf]
    %v46 = vld [vmem:[#allocation2 + $0x8] sm:$0xf]
    %v47 = vld [vmem:[#allocation2 + $0xc] sm:$0xf]
    %v48 = vld [vmem:[#allocation2 + $0x10] sm:$0xf]
    %v49 = vld [vmem:[#allocation2 + $0x14] sm:$0xf]
    %v50 = vld [vmem:[#allocation2 + $0x18] sm:$0xf]
    %v51 = vld [vmem:[#allocation2 + $0x1c] sm:$0xf]
    %v52 = vld [vmem:[#allocation2 + $0x20] sm:$0xf]
    %v53 = vld [vmem:[#allocation2 + $0x24] sm:$0xf]
    %v54 = vld [vmem:[#allocation2 + $0x28] sm:$0xf]
    %v55 = vld [vmem:[#allocation2 + $0x2c] sm:$0xf]
    %v56 = vld [vmem:[#allocation2 + $0x30] sm:$0xf]
    %v57 = vld [vmem:[#allocation2 + $0x34] sm:$0xf]
    %v58 = vld [vmem:[#allocation2 + $0x38] sm:$0xf]
    %v59 = vld [vmem:[#allocation2 + $0x3c] sm:$0xf]
    %v60 = vld [vmem:[#allocation5] sm:$0xf]
    %v61 = vld [vmem:[#allocation5 + $0x4] sm:$0xf]
    %v62 = vld [vmem:[#allocation5 + $0x8] sm:$0xf]
    %v63 = vld [vmem:[#allocation5 + $0xc] sm:$0xf]
    %v64 = vld [vmem:[#allocation5 + $0x10] sm:$0xf]
    %v65 = vld [vmem:[#allocation5 + $0x14] sm:$0xf]
    %v66 = vld [vmem:[#allocation5 + $0x18] sm:$0xf]
    %v67 = vld [vmem:[#allocation5 + $0x1c] sm:$0xf]
    %v68 = vld [vmem:[#allocation5 + $0x20] sm:$0xf]
    %v69 = vld [vmem:[#allocation5 + $0x24] sm:$0xf]
    %v70 = vld [vmem:[#allocation5 + $0x28] sm:$0xf]
    %v71 = vld [vmem:[#allocation5 + $0x2c] sm:$0xf]
    %v72 = vld [vmem:[#allocation5 + $0x30] sm:$0xf]
    %v73 = vld [vmem:[#allocation5 + $0x34] sm:$0xf]
    %v74 = vld [vmem:[#allocation5 + $0x38] sm:$0xf]
    %v75 = vld [vmem:[#allocation5 + $0x3c] sm:$0xf]
    %v92 = vunpack.c.l.b16 %v44
    %v93 = vunpack.c.l.b16 %v45
    %v94 = vunpack.c.l.b16 %v46
    %v95 = vunpack.c.l.b16 %v47
    %v96 = vunpack.c.l.b16 %v48
    %v97 = vunpack.c.l.b16 %v49
    %v98 = vunpack.c.l.b16 %v50
    %v99 = vunpack.c.l.b16 %v51
    %v100 = vunpack.c.l.b16 %v52
    %v101 = vunpack.c.l.b16 %v53
    %v102 = vunpack.c.l.b16 %v54
    %v103 = vunpack.c.l.b16 %v55
    %v104 = vunpack.c.l.b16 %v56
    %v105 = vunpack.c.l.b16 %v57
    %v106 = vunpack.c.l.b16 %v58
    %v107 = vunpack.c.l.b16 %v59
    %v108 = vpack.c.b16 %v93, %v92
    %v109 = vpack.c.b16 %v95, %v94
    %v110 = vpack.c.b16 %v97, %v96
    %v111 = vpack.c.b16 %v99, %v98
    %v112 = vpack.c.b16 %v101, %v100
    %v113 = vpack.c.b16 %v103, %v102
    %v114 = vpack.c.b16 %v105, %v104
    %v115 = vpack.c.b16 %v107, %v106
    %v140 = vunpack.c.l.b16 %v60
    %v141 = vunpack.c.l.b16 %v61
    %v142 = vunpack.c.l.b16 %v62
    %v143 = vunpack.c.l.b16 %v63
    %v144 = vunpack.c.l.b16 %v64
    %v145 = vunpack.c.l.b16 %v65
    %v146 = vunpack.c.l.b16 %v66
    %v147 = vunpack.c.l.b16 %v67
    %v148 = vunpack.c.l.b16 %v68
    %v149 = vunpack.c.l.b16 %v69
    %v150 = vunpack.c.l.b16 %v70
    %v151 = vunpack.c.l.b16 %v71
    %v152 = vunpack.c.l.b16 %v72
    %v153 = vunpack.c.l.b16 %v73
    %v154 = vunpack.c.l.b16 %v74
    %v155 = vunpack.c.l.b16 %v75
    %v156 = vpack.c.b16 %v141, %v140
    %v157 = vpack.c.b16 %v143, %v142
    %v158 = vpack.c.b16 %v145, %v144
    %v159 = vpack.c.b16 %v147, %v146
    %v160 = vpack.c.b16 %v149, %v148
    %v161 = vpack.c.b16 %v151, %v150
    %v162 = vpack.c.b16 %v153, %v152
    %v163 = vpack.c.b16 %v155, %v154
    %172 = vmatpush.bf16.msra.mxu0 %v163
    %173 = vmatpush.bf16.msra.mxu0 %v162
    %174 = vmatpush.bf16.msra.mxu0 %v161
    %175 = vmatpush.bf16.msra.mxu0 %v160
    %176 = vmatpush.bf16.msra.mxu0 %v159
    %177 = vmatpush.bf16.msra.mxu0 %v158
    %178 = vmatpush.bf16.msra.mxu0 %v157
    %179 = vmatpush.bf16.msra.mxu0 %v156
    %180 = vmatmul.bf16.gmra.mxu0 %v108
    %v181 = vpop.f32.mrf.mxu0
    %v182 = vadd.f32 0.0, %v181
    %v183 = vpop.f32.mrf.mxu0
    %v184 = vadd.f32 0.0, %v183
    %185 = vmatmul.bf16.gmra.mxu0 %v109
    %v186 = vpop.f32.mrf.mxu0
    %v187 = vadd.f32 0.0, %v186
    %v188 = vpop.f32.mrf.mxu0
    %v189 = vadd.f32 0.0, %v188
    %190 = vmatmul.bf16.gmra.mxu0 %v110
    %v191 = vpop.f32.mrf.mxu0
    %v192 = vadd.f32 0.0, %v191
    %v193 = vpop.f32.mrf.mxu0
    %v194 = vadd.f32 0.0, %v193
    %195 = vmatmul.bf16.gmra.mxu0 %v111
    %v196 = vpop.f32.mrf.mxu0
    %v197 = vadd.f32 0.0, %v196
    %v198 = vpop.f32.mrf.mxu0
    %v199 = vadd.f32 0.0, %v198
    %200 = vmatmul.bf16.gmra.mxu0 %v112
    %v201 = vpop.f32.mrf.mxu0
    %v202 = vadd.f32 0.0, %v201
    %v203 = vpop.f32.mrf.mxu0
    %v204 = vadd.f32 0.0, %v203
    %205 = vmatmul.bf16.gmra.mxu0 %v113
    %v206 = vpop.f32.mrf.mxu0
    %v207 = vadd.f32 0.0, %v206
    %v208 = vpop.f32.mrf.mxu0
    %v209 = vadd.f32 0.0, %v208
    %210 = vmatmul.bf16.gmra.mxu0 %v114
    %v211 = vpop.f32.mrf.mxu0
    %v212 = vadd.f32 0.0, %v211
    %v213 = vpop.f32.mrf.mxu0
    %v214 = vadd.f32 0.0, %v213
    %215 = vmatmul.bf16.gmra.mxu0 %v115
    %v216 = vpop.f32.mrf.mxu0
    %v217 = vadd.f32 0.0, %v216
    %v218 = vpop.f32.mrf.mxu0
    %v219 = vadd.f32 0.0, %v218
    %220 = vdwg.mxu0
    %v221 = vpack.c.bf16 %v182, %v182
    %v222 = vpack.c.bf16 %v184, %v184
    %v223 = vpack.c.bf16 %v187, %v187
    %v224 = vpack.c.bf16 %v189, %v189
    %v225 = vpack.c.bf16 %v192, %v192
    %v226 = vpack.c.bf16 %v194, %v194
    %v227 = vpack.c.bf16 %v197, %v197
    %v228 = vpack.c.bf16 %v199, %v199
    %v229 = vpack.c.bf16 %v202, %v202
    %v230 = vpack.c.bf16 %v204, %v204
    %v231 = vpack.c.bf16 %v207, %v207
    %v232 = vpack.c.bf16 %v209, %v209
    %v233 = vpack.c.bf16 %v212, %v212
    %v234 = vpack.c.bf16 %v214, %v214
    %v235 = vpack.c.bf16 %v217, %v217
    %v236 = vpack.c.bf16 %v219, %v219
    %237 = vst [vmem:[#allocation7] sm:$0xf] %v221
    %238 = vst [vmem:[#allocation7 + $0x4] sm:$0xf] %v222
    %239 = vst [vmem:[#allocation7 + $0x8] sm:$0xf] %v223
    %240 = vst [vmem:[#allocation7 + $0xc] sm:$0xf] %v224
    %241 = vst [vmem:[#allocation7 + $0x10] sm:$0xf] %v225
    %242 = vst [vmem:[#allocation7 + $0x14] sm:$0xf] %v226
    %243 = vst [vmem:[#allocation7 + $0x18] sm:$0xf] %v227
    %244 = vst [vmem:[#allocation7 + $0x1c] sm:$0xf] %v228
    %245 = vst [vmem:[#allocation7 + $0x20] sm:$0xf] %v229
    %246 = vst [vmem:[#allocation7 + $0x24] sm:$0xf] %v230
    %247 = vst [vmem:[#allocation7 + $0x28] sm:$0xf] %v231
    %248 = vst [vmem:[#allocation7 + $0x2c] sm:$0xf] %v232
    %249 = vst [vmem:[#allocation7 + $0x30] sm:$0xf] %v233
    %250 = vst [vmem:[#allocation7 + $0x34] sm:$0xf] %v234
    %251 = vst [vmem:[#allocation7 + $0x38] sm:$0xf] %v235
    %252 = vst [vmem:[#allocation7 + $0x3c] sm:$0xf] %v236
    // Predicated region
    $region18: #{tpu_custom_call.1} parent=1 // pred_check
      _
    $region19: #{tpu_custom_call.1} parent=1 // pred_check_branch
      %254 = sbr.rel (0) target = $region21
    $region20: #{tpu_custom_call.1} parent=1 // pred_region
      %256 = vsyncadd [#allocation4], 0
      %s257 = sshll.u32 [#allocation7], 4
      %s258 = int_to_ptr.vmem [resolvable:$true] %s257
      %s259 = sshll.u32 %s2, 4
      %s260 = int_to_ptr.hbm [resolvable:$true] %s259
      %265 = dma.vmem_to_hbm [thread:$0]  %s258, 1024, %s260, [#allocation4], 64, 64, 4
    $region21: #{tpu_custom_call.1} parent=1 // pred_fallthru
      _
    // Predicated region
    $region22: #{tpu_custom_call.1} parent=1 // pred_check
      _
    $region23: #{tpu_custom_call.1} parent=1 // pred_check_branch
      %267 = sbr.rel (0) target = $region25
    $region24: #{tpu_custom_call.1} parent=1 // pred_region
      %269 = dma.done [#allocation4], 1024
    $region25: #{tpu_custom_call.1} parent=1 // pred_fallthru
      _
    %270 = vsyncpa [#allocation3], 1
    %271 = vsyncpa [#allocation6], 1
    %272 = vsyncpa [#allocation4], 1

</llo_original>
